<compile_context>
chip_gen: v6e
topology: v6e:2x2x1
jax: 0.10.0
libtpu: 0.0.40
codegen_flags: <defaults>
</compile_context>

<pallas_src>
import functools

import jax
import jax.numpy as jnp
from jax.experimental import pallas as pl
from jax.experimental.pallas import tpu as pltpu


def _round_up(x, m):
    return ((x + m - 1) // m) * m


def _classification_net_kernel(
    alphas_ref,   # (2,) f32  SMEM scalar-prefetch: [alpha_emb, alpha_cls]
    x_ref,        # (TB, D_in)        VMEM, streamed
    w1_ref,       # (D_in, H)         VMEM, resident
    b1_ref,       # (1, H)            VMEM, resident
    w2_ref,       # (H, 2)            VMEM, resident
    b2_ref,       # (1, 2)            VMEM, resident
    wfc_ref,      # (2, n_classes)    VMEM, resident
    bfc_ref,      # (1, n_classes)    VMEM, resident
    out_ref,      # (TB, n_classes)   VMEM log-probabilities
):
    x = x_ref[...].astype(jnp.float32)

    # ---- embedding_net: Linear -> PReLU -> Linear ----
    h = jnp.dot(x, w1_ref[...], preferred_element_type=jnp.float32) + b1_ref[...]
    a1 = alphas_ref[0]
    h = jnp.where(h > 0.0, h, a1 * h)                      # PReLU (single param)

    emb = jnp.dot(h, w2_ref[...], preferred_element_type=jnp.float32) + b2_ref[...]

    # ---- ClassificationNet.nonlinear (PReLU, single param) ----
    a2 = alphas_ref[1]
    emb = jnp.where(emb > 0.0, emb, a2 * emb)              # (TB, 2)

    # ---- fc1: Linear(2, n_classes) on the MXU (idle at this point) ----
    logits = (jnp.dot(emb, wfc_ref[...], preferred_element_type=jnp.float32)
              + bfc_ref[...])                              # (TB, n_classes)

    # ---- numerically-stable log_softmax (no padded lanes -> no masking) ----
    m = jnp.max(logits, axis=-1, keepdims=True)
    z = logits - m
    lse = jnp.log(jnp.sum(jnp.exp(z), axis=-1, keepdims=True))
    out_ref[...] = z - lse


def classification_net_forward(x, params, *, tb_max=1024):
    B, D_in = x.shape
    H = params["w1"].shape[1]
    n_classes = params["w_fc"].shape[1]

    # Tile-count selection:
    #  * at least cdiv(B, tb_max) so each tile fits the tile-size cap,
    #  * at least 2 tiles once B >= 16 so the "parallel" batch axis can shard
    #    across both TensorCores on v7x,
    #  * TB derived from cdiv(B, n_tiles) keeps batch-padding waste small
    #    (at most n_tiles*8 - 1 padded rows).
    n_tiles = max(pl.cdiv(B, tb_max), 2 if B >= 16 else 1)
    TB = _round_up(pl.cdiv(B, n_tiles), 8)
    B_pad = n_tiles * TB
    if B_pad != B:
        x = jnp.pad(x, ((0, B_pad - B), (0, 0)))

    # Pack the two PReLU alphas into a single scalar-prefetch array (SMEM).
    alphas = jnp.concatenate(
        [params["alpha_emb"].reshape(1), params["alpha_cls"].reshape(1)]
    ).astype(jnp.float32)

    cost = pl.CostEstimate(
        flops=2 * B_pad * (D_in * H + H * 2 + 2 * n_classes),
        transcendentals=B_pad * (n_classes + 1),
        bytes_accessed=4 * (B_pad * (D_in + n_classes)
                            + D_in * H + H + H * 2 + 2
                            + 2 * n_classes + n_classes),
    )

    out = pl.pallas_call(
        _classification_net_kernel,
        out_shape=jax.ShapeDtypeStruct((B_pad, n_classes), jnp.float32),
        grid_spec=pltpu.PrefetchScalarGridSpec(
            num_scalar_prefetch=1,
            grid=(n_tiles,),
            in_specs=[
                pl.BlockSpec((TB, D_in), lambda i, a: (i, 0)),        # x: streamed
                pl.BlockSpec((D_in, H), lambda i, a: (0, 0)),         # w1: resident
                pl.BlockSpec((1, H), lambda i, a: (0, 0)),            # b1
                pl.BlockSpec((H, 2), lambda i, a: (0, 0)),            # w2
                pl.BlockSpec((1, 2), lambda i, a: (0, 0)),            # b2
                pl.BlockSpec((2, n_classes), lambda i, a: (0, 0)),    # w_fc
                pl.BlockSpec((1, n_classes), lambda i, a: (0, 0)),    # b_fc
            ],
            out_specs=pl.BlockSpec((TB, n_classes), lambda i, a: (i, 0)),
        ),
        compiler_params=pltpu.CompilerParams(
            dimension_semantics=("parallel",),
        ),
        cost_estimate=cost,
    )(
        alphas,
        x,
        params["w1"], params["b1"],
        params["w2"], params["b2"],
        params["w_fc"], params["b_fc"],
    )
    if B_pad != B:
        out = out[:B]
    return out


def init_params(key, d_in, hidden, n_classes):
    k1, k2, k3, k4, k5, k6 = jax.random.split(key, 6)

    # Deterministic, roughly torch-Linear-like uniform init.
    def lin(kw, kb, fan_in, fan_out):
        bound = 1.0 / jnp.sqrt(jnp.float32(fan_in))
        w = jax.random.uniform(kw, (fan_in, fan_out), jnp.float32, -bound, bound)
        b = jax.random.uniform(kb, (1, fan_out), jnp.float32, -bound, bound)
        return w, b

    w1, b1 = lin(k1, k2, d_in, hidden)
    w2, b2 = lin(k3, k4, hidden, 2)
    w_fc, b_fc = lin(k5, k6, 2, n_classes)
    return {
        "w1": w1, "b1": b1,
        "w2": w2, "b2": b2,
        "w_fc": w_fc, "b_fc": b_fc,
        # nn.PReLU() default: single shared parameter initialized to 0.25
        "alpha_emb": jnp.full((1, 1), 0.25, jnp.float32),
        "alpha_cls": jnp.full((1, 1), 0.25, jnp.float32),
    }


def _ref_forward(x, params):
    h = x @ params["w1"] + params["b1"]
    h = jnp.where(h > 0, h, params["alpha_emb"][0, 0] * h)
    emb = h @ params["w2"] + params["b2"]
    emb = jnp.where(emb > 0, emb, params["alpha_cls"][0, 0] * emb)
    logits = emb @ params["w_fc"] + params["b_fc"]
    return jax.nn.log_softmax(logits, axis=-1)


def _check(x, params, n_classes):
    scores = jax.block_until_ready(classification_net_forward(x, params))
    B = x.shape[0]
    assert scores.shape == (B, n_classes)
    assert bool(jnp.all(jnp.isfinite(scores)))
    row_sums = jnp.sum(jnp.exp(scores), axis=-1)
    assert bool(jnp.all(jnp.abs(row_sums - 1.0) < 1e-4))
    ref = _ref_forward(x, params)
    assert bool(jnp.all(jnp.abs(scores - ref) < 1e-4))


if __name__ == "__main__":
    key = jax.random.PRNGKey(0)
    kx1, kx2, kp = jax.random.split(key, 3)

    D_in, H, N_CLASSES = 32, 32, 10
    params = init_params(kp, D_in, H, N_CLASSES)

    # Single-tile case (B small).
    x_small = jax.random.normal(kx1, (8, D_in), jnp.float32)
    _check(x_small, params, N_CLASSES)

    # Multi-tile case (exercises >=2 grid tiles and row padding of last tile).
    x_multi = jax.random.normal(kx2, (40, D_in), jnp.float32)
    _check(x_multi, params, N_CLASSES)

    print("KERNEL_OK")
</pallas_src>

<mosaic_0001>
module attributes {stable_mosaic.version = 11 : i64} {
  func.func @_classification_net_kernel(%arg0: i32, %arg1: memref<2xf32, #tpu.memory_space<smem>>, %arg2: memref<8x32xf32, #tpu.memory_space<vmem>>, %arg3: memref<32x32xf32, #tpu.memory_space<vmem>>, %arg4: memref<1x32xf32, #tpu.memory_space<vmem>>, %arg5: memref<32x2xf32, #tpu.memory_space<vmem>>, %arg6: memref<1x2xf32, #tpu.memory_space<vmem>>, %arg7: memref<2x10xf32, #tpu.memory_space<vmem>>, %arg8: memref<1x10xf32, #tpu.memory_space<vmem>>, %arg9: memref<8x10xf32, #tpu.memory_space<vmem>>) attributes {dimension_semantics = [#tpu.dimension_semantics<parallel>], iteration_bounds = array<i64: 1>, scalar_prefetch = 1 : i64, scratch_operands = 0 : i64, tpu.core_type = #tpu.core_type<tc>, window_params = [{transform_indices = @transform_0, window_bounds = array<i64: 8, 32>}, {pipeline_mode = #tpu.pipeline_mode<synchronous>, transform_indices = @transform_1, window_bounds = array<i64: 32, 32>}, {pipeline_mode = #tpu.pipeline_mode<synchronous>, transform_indices = @transform_2, window_bounds = array<i64: 1, 32>}, {pipeline_mode = #tpu.pipeline_mode<synchronous>, transform_indices = @transform_3, window_bounds = array<i64: 32, 2>}, {pipeline_mode = #tpu.pipeline_mode<synchronous>, transform_indices = @transform_4, window_bounds = array<i64: 1, 2>}, {pipeline_mode = #tpu.pipeline_mode<synchronous>, transform_indices = @transform_5, window_bounds = array<i64: 2, 10>}, {pipeline_mode = #tpu.pipeline_mode<synchronous>, transform_indices = @transform_6, window_bounds = array<i64: 1, 10>}, {transform_indices = @transform_7, window_bounds = array<i64: 8, 10>}]} {
    %c0 = arith.constant 0 : index
    %c0_0 = arith.constant 0 : index
    %0 = vector.load %arg2[%c0, %c0_0] : memref<8x32xf32, #tpu.memory_space<vmem>>, vector<8x32xf32>
    %c0_1 = arith.constant 0 : index
    %c0_2 = arith.constant 0 : index
    %1 = vector.load %arg3[%c0_1, %c0_2] : memref<32x32xf32, #tpu.memory_space<vmem>>, vector<32x32xf32>
    %cst = arith.constant dense<0.000000e+00> : vector<8x32xf32>
    %2 = tpu.matmul %0, %1, %cst {dimension_numbers = #tpu.dot_dimension_numbers<[1], [0], [0], [1], [0, 0, 1, 1], [], []>} : vector<8x32xf32>, vector<32x32xf32>, vector<8x32xf32> -> vector<8x32xf32>
    %c0_3 = arith.constant 0 : index
    %c0_4 = arith.constant 0 : index
    %3 = vector.load %arg4[%c0_3, %c0_4] : memref<1x32xf32, #tpu.memory_space<vmem>>, vector<1x32xf32>
    %4 = vector.broadcast %3 : vector<1x32xf32> to vector<8x32xf32>
    %5 = arith.addf %2, %4 : vector<8x32xf32>
    %c0_5 = arith.constant 0 : index
    %6 = memref.load %arg1[%c0_5] : memref<2xf32, #tpu.memory_space<smem>>
    %cst_6 = arith.constant 0.000000e+00 : f32
    %7 = vector.broadcast %cst_6 : f32 to vector<8x32xf32>
    %8 = arith.cmpf ogt, %5, %7 : vector<8x32xf32>
    %9 = vector.broadcast %6 : f32 to vector<8x32xf32>
    %10 = arith.mulf %9, %5 : vector<8x32xf32>
    %11 = arith.select %8, %5, %10 : vector<8x32xi1>, vector<8x32xf32>
    %c0_7 = arith.constant 0 : index
    %c0_8 = arith.constant 0 : index
    %12 = vector.load %arg5[%c0_7, %c0_8] : memref<32x2xf32, #tpu.memory_space<vmem>>, vector<32x2xf32>
    %cst_9 = arith.constant dense<0.000000e+00> : vector<8x2xf32>
    %13 = tpu.matmul %11, %12, %cst_9 {dimension_numbers = #tpu.dot_dimension_numbers<[1], [0], [0], [1], [0, 0, 1, 1], [], []>} : vector<8x32xf32>, vector<32x2xf32>, vector<8x2xf32> -> vector<8x2xf32>
    %c0_10 = arith.constant 0 : index
    %c0_11 = arith.constant 0 : index
    %14 = vector.load %arg6[%c0_10, %c0_11] : memref<1x2xf32, #tpu.memory_space<vmem>>, vector<1x2xf32>
    %15 = vector.broadcast %14 : vector<1x2xf32> to vector<8x2xf32>
    %16 = arith.addf %13, %15 : vector<8x2xf32>
    %c1 = arith.constant 1 : index
    %17 = memref.load %arg1[%c1] : memref<2xf32, #tpu.memory_space<smem>>
    %cst_12 = arith.constant 0.000000e+00 : f32
    %18 = vector.broadcast %cst_12 : f32 to vector<8x2xf32>
    %19 = arith.cmpf ogt, %16, %18 : vector<8x2xf32>
    %20 = vector.broadcast %17 : f32 to vector<8x2xf32>
    %21 = arith.mulf %20, %16 : vector<8x2xf32>
    %22 = arith.select %19, %16, %21 : vector<8x2xi1>, vector<8x2xf32>
    %c0_13 = arith.constant 0 : index
    %c0_14 = arith.constant 0 : index
    %23 = vector.load %arg7[%c0_13, %c0_14] : memref<2x10xf32, #tpu.memory_space<vmem>>, vector<2x10xf32>
    %cst_15 = arith.constant dense<0.000000e+00> : vector<8x10xf32>
    %24 = tpu.matmul %22, %23, %cst_15 {dimension_numbers = #tpu.dot_dimension_numbers<[1], [0], [0], [1], [0, 0, 1, 1], [], []>} : vector<8x2xf32>, vector<2x10xf32>, vector<8x10xf32> -> vector<8x10xf32>
    %c0_16 = arith.constant 0 : index
    %c0_17 = arith.constant 0 : index
    %25 = vector.load %arg8[%c0_16, %c0_17] : memref<1x10xf32, #tpu.memory_space<vmem>>, vector<1x10xf32>
    %26 = vector.broadcast %25 : vector<1x10xf32> to vector<8x10xf32>
    %27 = arith.addf %24, %26 : vector<8x10xf32>
    %cst_18 = arith.constant dense<0xFF800000> : vector<8xf32>
    %28 = vector.multi_reduction <maximumf>, %27, %cst_18 [1] : vector<8x10xf32> to vector<8xf32>
    %29 = vector.shape_cast %28 : vector<8xf32> to vector<8x1xf32>
    %30 = vector.broadcast %29 : vector<8x1xf32> to vector<8x10xf32>
    %31 = arith.subf %27, %30 : vector<8x10xf32>
    %32 = math.exp %31 : vector<8x10xf32>
    %cst_19 = arith.constant dense<0.000000e+00> : vector<8xf32>
    %33 = vector.multi_reduction <add>, %32, %cst_19 [1] : vector<8x10xf32> to vector<8xf32>
    %34 = vector.shape_cast %33 : vector<8xf32> to vector<8x1xf32>
    %35 = math.log %34 : vector<8x1xf32>
    %36 = vector.broadcast %35 : vector<8x1xf32> to vector<8x10xf32>
    %37 = arith.subf %31, %36 : vector<8x10xf32>
    %c0_20 = arith.constant 0 : index
    %c0_21 = arith.constant 0 : index
    %38 = vector.load %arg9[%c0_20, %c0_21] : memref<8x10xf32, #tpu.memory_space<vmem>>, vector<8x10xf32>
    tpu.vector_store %arg9[%c0_20, %c0_21], %37 {strides = array<i32>} : memref<8x10xf32, #tpu.memory_space<vmem>>, vector<8x10xf32>,
    return
  }
  func.func @transform_0(%arg0: i32, %arg1: memref<2xf32, #tpu.memory_space<smem>>) -> (i32, i32) {
    %c0_i32 = arith.constant 0 : i32
    %c0_i32_0 = arith.constant 0 : i32
    return %arg0, %c0_i32 : i32, i32
  }
  func.func @transform_1(%arg0: i32, %arg1: memref<2xf32, #tpu.memory_space<smem>>) -> (i32, i32) {
    %c0_i32 = arith.constant 0 : i32
    %c0_i32_0 = arith.constant 0 : i32
    %c0_i32_1 = arith.constant 0 : i32
    return %c0_i32, %c0_i32_0 : i32, i32
  }
  func.func @transform_2(%arg0: i32, %arg1: memref<2xf32, #tpu.memory_space<smem>>) -> (i32, i32) {
    %c0_i32 = arith.constant 0 : i32
    %c0_i32_0 = arith.constant 0 : i32
    %c0_i32_1 = arith.constant 0 : i32
    return %c0_i32, %c0_i32_0 : i32, i32
  }
  func.func @transform_3(%arg0: i32, %arg1: memref<2xf32, #tpu.memory_space<smem>>) -> (i32, i32) {
    %c0_i32 = arith.constant 0 : i32
    %c0_i32_0 = arith.constant 0 : i32
    %c0_i32_1 = arith.constant 0 : i32
    return %c0_i32, %c0_i32_0 : i32, i32
  }
  func.func @transform_4(%arg0: i32, %arg1: memref<2xf32, #tpu.memory_space<smem>>) -> (i32, i32) {
    %c0_i32 = arith.constant 0 : i32
    %c0_i32_0 = arith.constant 0 : i32
    %c0_i32_1 = arith.constant 0 : i32
    return %c0_i32, %c0_i32_0 : i32, i32
  }
  func.func @transform_5(%arg0: i32, %arg1: memref<2xf32, #tpu.memory_space<smem>>) -> (i32, i32) {
    %c0_i32 = arith.constant 0 : i32
    %c0_i32_0 = arith.constant 0 : i32
    %c0_i32_1 = arith.constant 0 : i32
    return %c0_i32, %c0_i32_0 : i32, i32
  }
  func.func @transform_6(%arg0: i32, %arg1: memref<2xf32, #tpu.memory_space<smem>>) -> (i32, i32) {
    %c0_i32 = arith.constant 0 : i32
    %c0_i32_0 = arith.constant 0 : i32
    %c0_i32_1 = arith.constant 0 : i32
    return %c0_i32, %c0_i32_0 : i32, i32
  }
  func.func @transform_7(%arg0: i32, %arg1: memref<2xf32, #tpu.memory_space<smem>>) -> (i32, i32) {
    %c0_i32 = arith.constant 0 : i32
    %c0_i32_0 = arith.constant 0 : i32
    return %arg0, %c0_i32 : i32, i32
  }
}

</mosaic_0001>

<llo_original>
// kernel: tpu_custom_call.1
$region0: #{tpu_custom_call.1}
  #allocation0 [shape = 'u32[]', space=smem, size = 0x4, offset = 0x4, fixed_abs, tag = 'smem constant byte address 0x4 - core index']
  #allocation1 [shape = 'u32[144,128]{1,0:T(1,128)}', space=vmem, size = 0x12000, scoped, tag = 'internal scratch']
  #allocation2 [shape = 's32[1]{0}', space=sflag, size = 0x4, scoped, tag = 'scoped memory for tpu_custom_call.1']
  #allocation3 [shape = 'u8[512]{0}', space=smem, size = 0x200, scoped, tag = 'prefetched SMEM operand 0']
  %s0 = inlined_call_operand.vmem [shape: f32[2], index: 0, kind: input, shape index: {}]
  %s1 = inlined_call_operand.hbm [shape: f32[8,32], index: 1, kind: input, shape index: {}]
  %s2 = inlined_call_operand.vmem [shape: f32[32,32], index: 2, kind: input, shape index: {}]
  %s3 = inlined_call_operand.vmem [shape: f32[1,32], index: 3, kind: input, shape index: {}]
  %s4 = inlined_call_operand.vmem [shape: f32[32,2], index: 4, kind: input, shape index: {}]
  %s5 = inlined_call_operand.vmem [shape: f32[1,2], index: 5, kind: input, shape index: {}]
  %s6 = inlined_call_operand.vmem [shape: f32[2,10], index: 6, kind: input, shape index: {}]
  %s7 = inlined_call_operand.vmem [shape: f32[1,10], index: 7, kind: input, shape index: {}]
  %s8 = inlined_call_operand.hbm [shape: f32[8,10], index: 8, kind: output, shape index: {}]
  %s9 = sld [smem:[#allocation0]]
  $region42: #{tpu_custom_call.1} parent=0
    _
  %s11 = ssub.s32 1, %s9
  %s12 = scalar_select 0, %s11, %s9
  %s13 = sshll.u32 %s0, 4
  %s14 = int_to_ptr.vmem [resolvable:$true] %s13
  %16 = dma.vmem_to_smem %s14, 16, [#allocation3], [#allocation2]
  %17 = dma.done [#allocation2], 16
  %18 = sfence
  $region1: #{tpu_custom_call.1} parent=0
    #allocation4 [shape = 'u8[4096]{0}', space=vmem, size = 0x1000, scoped, tag = 'input window, operand 1, single buffered']
    #allocation5 [shape = 's32[1]{0}', space=sflag, size = 0x4, scoped, tag = 'scoped memory for tpu_custom_call.1']
    #allocation6 [shape = 's32[1]{0}', space=sflag, size = 0x4, scoped, tag = 'scoped memory for tpu_custom_call.1']
    #allocation7 [shape = 'u8[4096]{0}', space=vmem, size = 0x1000, scoped, tag = 'output window, operand 0, single buffered']
    %19 = vsyncpa [#allocation5], 0
    %20 = vsyncpa [#allocation6], 0
    // Predicated region
    $region2: #{tpu_custom_call.1} parent=1 // pred_check
      _
    $region3: #{tpu_custom_call.1} parent=1 // pred_check_branch
      %22 = sbr.rel (0) target = $region5
    $region4: #{tpu_custom_call.1} parent=1 // pred_region
      %s24 = ssub.s32 128, 128
      %25 = vsyncadd [#allocation5], %s24
      %s27 = sshll.u32 [#allocation4], 4
      %s28 = int_to_ptr.vmem [resolvable:$true] %s27
      %30 = dma.hbm_to_vmem [thread:$0]  %s1, 128, %s28, [#allocation5]
    $region5: #{tpu_custom_call.1} parent=1 // pred_fallthru
      _
    // Predicated region
    $region6: #{tpu_custom_call.1} parent=1 // pred_check
      _
    $region7: #{tpu_custom_call.1} parent=1 // pred_check_branch
      %32 = sbr.rel (0) target = $region9
    $region8: #{tpu_custom_call.1} parent=1 // pred_region
      _
    $region9: #{tpu_custom_call.1} parent=1 // pred_fallthru
      _
    // Predicated region
    $region10: #{tpu_custom_call.1} parent=1 // pred_check
      _
    $region11: #{tpu_custom_call.1} parent=1 // pred_check_branch
      %34 = sbr.rel (0) target = $region13
    $region12: #{tpu_custom_call.1} parent=1 // pred_region
      _
    $region13: #{tpu_custom_call.1} parent=1 // pred_fallthru
      _
    // Predicated region
    $region14: #{tpu_custom_call.1} parent=1 // pred_check
      _
    $region15: #{tpu_custom_call.1} parent=1 // pred_check_branch
      %36 = sbr.rel (0) target = $region17
    $region16: #{tpu_custom_call.1} parent=1 // pred_region
      _
    $region17: #{tpu_custom_call.1} parent=1 // pred_fallthru
      _
    // Predicated region
    $region18: #{tpu_custom_call.1} parent=1 // pred_check
      _
    $region19: #{tpu_custom_call.1} parent=1 // pred_check_branch
      %38 = sbr.rel (0) target = $region21
    $region20: #{tpu_custom_call.1} parent=1 // pred_region
      _
    $region21: #{tpu_custom_call.1} parent=1 // pred_fallthru
      _
    // Predicated region
    $region22: #{tpu_custom_call.1} parent=1 // pred_check
      _
    $region23: #{tpu_custom_call.1} parent=1 // pred_check_branch
      %40 = sbr.rel (0) target = $region25
    $region24: #{tpu_custom_call.1} parent=1 // pred_region
      _
    $region25: #{tpu_custom_call.1} parent=1 // pred_fallthru
      _
    // Predicated region
    $region26: #{tpu_custom_call.1} parent=1 // pred_check
      _
    $region27: #{tpu_custom_call.1} parent=1 // pred_check_branch
      %42 = sbr.rel (0) target = $region29
    $region28: #{tpu_custom_call.1} parent=1 // pred_region
      _
    $region29: #{tpu_custom_call.1} parent=1 // pred_fallthru
      _
    // Predicated region
    $region30: #{tpu_custom_call.1} parent=1 // pred_check
      _
    $region31: #{tpu_custom_call.1} parent=1 // pred_check_branch
      %44 = sbr.rel (0) target = $region33
    $region32: #{tpu_custom_call.1} parent=1 // pred_region
      %45 = dma.done [#allocation5], 128
    $region33: #{tpu_custom_call.1} parent=1 // pred_fallthru
      _
    %v46 = vld [vmem:[#allocation4] sm:$0xff]
    %v47 = vld [vmem:[%s2] sm:$0xff]
    %v48 = vld [vmem:[%s2 + $0x8] sm:$0xff]
    %v49 = vld [vmem:[%s2 + $0x10] sm:$0xff]
    %v50 = vld [vmem:[%s2 + $0x18] sm:$0xff]
    %v51 = vld [vmem:[%s3] sm:$0x1]
    %v53 = vlaneseq
    %v54 = vshrl.u32 %v53, 7
    %v55 = vsub.s32 0, %v54
    %v56 = vrot.slane %v51, %v55
    %vm58 = vcmask 261120
    %v60 = vsel %vm58, %v46, 0
    %62 = vmatprep.subr.mxu0 0.0
    %63 = vmatpush1.msra.mxu0 0.0
    %64 = vmatprep.subr.mxu0 0.0
    %65 = vmatpush1.msra.mxu0 0.0
    %66 = vmatprep.subr.mxu0 0.0
    %67 = vmatpush1.msra.mxu0 0.0
    %68 = vmatprep.subr.mxu0 0.0
    %69 = vmatpush1.msra.mxu0 0.0
    %70 = vmatprep.subr.mxu0 0.0
    %71 = vmatpush1.msra.mxu0 0.0
    %72 = vmatprep.subr.mxu0 0.0
    %73 = vmatpush1.msra.mxu0 0.0
    %74 = vmatprep.subr.mxu0 0.0
    %75 = vmatpush1.msra.mxu0 0.0
    %76 = vmatprep.subr.mxu0 0.0
    %77 = vmatpush1.msra.mxu0 0.0
    %78 = vmatprep.subr.mxu0 0.0
    %79 = vmatpush1.msra.mxu0 0.0
    %80 = vmatprep.subr.mxu0 0.0
    %81 = vmatpush1.msra.mxu0 0.0
    %82 = vmatprep.subr.mxu0 0.0
    %83 = vmatpush1.msra.mxu0 0.0
    %84 = vmatprep.subr.mxu0 0.0
    %85 = vmatpush1.msra.mxu0 0.0
    %86 = vmatprep.subr.mxu0 0.0
    %87 = vmatpush1.msra.mxu0 %v50
    %88 = vmatprep.subr.mxu0 0.0
    %89 = vmatpush1.msra.mxu0 %v49
    %90 = vmatprep.subr.mxu0 0.0
    %91 = vmatpush1.msra.mxu0 %v48
    %92 = vmatprep.subr.mxu0 0.0
    %93 = vmatpush1.msra.mxu0 %v47
    %94 = vmatprep.subr.mxu0 0.0
    %95 = vmatpush2.msra.mxu0 0.0
    %96 = vmatprep.subr.mxu0 0.0
    %97 = vmatpush2.msra.mxu0 0.0
    %98 = vmatprep.subr.mxu0 0.0
    %99 = vmatpush2.msra.mxu0 0.0
    %100 = vmatprep.subr.mxu0 0.0
    %101 = vmatpush2.msra.mxu0 0.0
    %102 = vmatprep.subr.mxu0 0.0
    %103 = vmatpush2.msra.mxu0 0.0
    %104 = vmatprep.subr.mxu0 0.0
    %105 = vmatpush2.msra.mxu0 0.0
    %106 = vmatprep.subr.mxu0 0.0
    %107 = vmatpush2.msra.mxu0 0.0
    %108 = vmatprep.subr.mxu0 0.0
    %109 = vmatpush2.msra.mxu0 0.0
    %110 = vmatprep.subr.mxu0 0.0
    %111 = vmatpush2.msra.mxu0 0.0
    %112 = vmatprep.subr.mxu0 0.0
    %113 = vmatpush2.msra.mxu0 0.0
    %114 = vmatprep.subr.mxu0 0.0
    %115 = vmatpush2.msra.mxu0 0.0
    %116 = vmatprep.subr.mxu0 0.0
    %117 = vmatpush2.msra.mxu0 0.0
    %118 = vmatprep.subr.mxu0 0.0
    %119 = vmatpush2.msra.mxu0 0.0
    %120 = vmatprep.subr.mxu0 0.0
    %121 = vmatpush2.msra.mxu0 0.0
    %122 = vmatprep.subr.mxu0 0.0
    %123 = vmatpush2.msra.mxu0 0.0
    %124 = vmatprep.subr.mxu0 0.0
    %125 = vmatpush2.msra.mxu0 0.0
    %126 = vmatprep.mubr.f32.mxu0 0.0
    %127 = vmatmul.mubr.f32.gmra.mxu0 %v60
    %v128 = vpop.f32.mrf.mxu0
    %v129 = vadd.f32 %v56, %v128
    %v130 = vpop.f32.mrf.mxu0
    %131 = vdwg.mxu0
    %s132 = sld [smem:[#allocation3]]
    %vm133 = vcmp.gt.f32.partialorder %v129, 0.0
    %v134 = vstv %s132
    %v135 = vmul.f32 %v134, %v129
    %v136 = vsel %vm133, %v129, %v135
    %v137 = vld [vmem:[%s4] sm:$0xff]
    %v138 = vld [vmem:[%s4 + $0x8] sm:$0xff]
    %v139 = vld [vmem:[%s4 + $0x10] sm:$0xff]
    %v140 = vld [vmem:[%s4 + $0x18] sm:$0xff]
    %v141 = vld [vmem:[%s5] sm:$0x1]
    %v143 = vlaneseq
    %v144 = vshrl.u32 %v143, 7
    %v145 = vsub.s32 0, %v144
    %v146 = vrot.slane %v141, %v145
    %v149 = vsel %vm58, %v136, 0
    %151 = vmatprep.subr.mxu0 0.0
    %152 = vmatpush1.msra.mxu0 0.0
    %153 = vmatprep.subr.mxu0 0.0
    %154 = vmatpush1.msra.mxu0 0.0
    %155 = vmatprep.subr.mxu0 0.0
    %156 = vmatpush1.msra.mxu0 0.0
    %157 = vmatprep.subr.mxu0 0.0
    %158 = vmatpush1.msra.mxu0 0.0
    %159 = vmatprep.subr.mxu0 0.0
    %160 = vmatpush1.msra.mxu0 0.0
    %161 = vmatprep.subr.mxu0 0.0
    %162 = vmatpush1.msra.mxu0 0.0
    %163 = vmatprep.subr.mxu0 0.0
    %164 = vmatpush1.msra.mxu0 0.0
    %165 = vmatprep.subr.mxu0 0.0
    %166 = vmatpush1.msra.mxu0 0.0
    %167 = vmatprep.subr.mxu0 0.0
    %168 = vmatpush1.msra.mxu0 0.0
    %169 = vmatprep.subr.mxu0 0.0
    %170 = vmatpush1.msra.mxu0 0.0
    %171 = vmatprep.subr.mxu0 0.0
    %172 = vmatpush1.msra.mxu0 0.0
    %173 = vmatprep.subr.mxu0 0.0
    %174 = vmatpush1.msra.mxu0 0.0
    %175 = vmatprep.subr.mxu0 0.0
    %176 = vmatpush1.msra.mxu0 %v140
    %177 = vmatprep.subr.mxu0 0.0
    %178 = vmatpush1.msra.mxu0 %v139
    %179 = vmatprep.subr.mxu0 0.0
    %180 = vmatpush1.msra.mxu0 %v138
    %181 = vmatprep.subr.mxu0 0.0
    %182 = vmatpush1.msra.mxu0 %v137
    %183 = vmatprep.subr.mxu0 0.0
    %184 = vmatpush2.msra.mxu0 0.0
    %185 = vmatprep.subr.mxu0 0.0
    %186 = vmatpush2.msra.mxu0 0.0
    %187 = vmatprep.subr.mxu0 0.0
    %188 = vmatpush2.msra.mxu0 0.0
    %189 = vmatprep.subr.mxu0 0.0
    %190 = vmatpush2.msra.mxu0 0.0
    %191 = vmatprep.subr.mxu0 0.0
    %192 = vmatpush2.msra.mxu0 0.0
    %193 = vmatprep.subr.mxu0 0.0
    %194 = vmatpush2.msra.mxu0 0.0
    %195 = vmatprep.subr.mxu0 0.0
    %196 = vmatpush2.msra.mxu0 0.0
    %197 = vmatprep.subr.mxu0 0.0
    %198 = vmatpush2.msra.mxu0 0.0
    %199 = vmatprep.subr.mxu0 0.0
    %200 = vmatpush2.msra.mxu0 0.0
    %201 = vmatprep.subr.mxu0 0.0
    %202 = vmatpush2.msra.mxu0 0.0
    %203 = vmatprep.subr.mxu0 0.0
    %204 = vmatpush2.msra.mxu0 0.0
    %205 = vmatprep.subr.mxu0 0.0
    %206 = vmatpush2.msra.mxu0 0.0
    %207 = vmatprep.subr.mxu0 0.0
    %208 = vmatpush2.msra.mxu0 0.0
    %209 = vmatprep.subr.mxu0 0.0
    %210 = vmatpush2.msra.mxu0 0.0
    %211 = vmatprep.subr.mxu0 0.0
    %212 = vmatpush2.msra.mxu0 0.0
    %213 = vmatprep.subr.mxu0 0.0
    %214 = vmatpush2.msra.mxu0 0.0
    %215 = vmatprep.mubr.f32.mxu0 0.0
    %216 = vmatmul.mubr.f32.gmra.mxu0 %v149
    %v217 = vpop.f32.mrf.mxu0
    %v218 = vadd.f32 %v146, %v217
    %v219 = vpop.f32.mrf.mxu0
    %220 = vdwg.mxu0
    %s221 = sld [smem:[#allocation3 + $0x1]]
    %vm222 = vcmp.gt.f32.partialorder %v218, 0.0
    %v223 = vstv %s221
    %v224 = vmul.f32 %v223, %v218
    %v225 = vsel %vm222, %v218, %v224
    %v226 = vld [vmem:[%s6] sm:$0x3]
    %v227 = vld [vmem:[%s7] sm:$0x1]
    %v229 = vlaneseq
    %v230 = vshrl.u32 %v229, 7
    %v231 = vsub.s32 0, %v230
    %v232 = vrot.slane %v227, %v231
    %vm234 = vcmask 15360
    %v236 = vsel %vm234, %v225, 0
    %vm238 = vcmask 1041408
    %v240 = vsel %vm238, %v226, 0
    %242 = vmatprep.subr.mxu0 0.0
    %243 = vmatpush1.msra.mxu0 0.0
    %244 = vmatprep.subr.mxu0 0.0
    %245 = vmatpush1.msra.mxu0 0.0
    %246 = vmatprep.subr.mxu0 0.0
    %247 = vmatpush1.msra.mxu0 0.0
    %248 = vmatprep.subr.mxu0 0.0
    %249 = vmatpush1.msra.mxu0 0.0
    %250 = vmatprep.subr.mxu0 0.0
    %251 = vmatpush1.msra.mxu0 0.0
    %252 = vmatprep.subr.mxu0 0.0
    %253 = vmatpush1.msra.mxu0 0.0
    %254 = vmatprep.subr.mxu0 0.0
    %255 = vmatpush1.msra.mxu0 0.0
    %256 = vmatprep.subr.mxu0 0.0
    %257 = vmatpush1.msra.mxu0 0.0
    %258 = vmatprep.subr.mxu0 0.0
    %259 = vmatpush1.msra.mxu0 0.0
    %260 = vmatprep.subr.mxu0 0.0
    %261 = vmatpush1.msra.mxu0 0.0
    %262 = vmatprep.subr.mxu0 0.0
    %263 = vmatpush1.msra.mxu0 0.0
    %264 = vmatprep.subr.mxu0 0.0
    %265 = vmatpush1.msra.mxu0 0.0
    %266 = vmatprep.subr.mxu0 0.0
    %267 = vmatpush1.msra.mxu0 0.0
    %268 = vmatprep.subr.mxu0 0.0
    %269 = vmatpush1.msra.mxu0 0.0
    %270 = vmatprep.subr.mxu0 0.0
    %271 = vmatpush1.msra.mxu0 0.0
    %272 = vmatprep.subr.mxu0 0.0
    %273 = vmatpush1.msra.mxu0 %v240
    %274 = vmatprep.subr.mxu0 0.0
    %275 = vmatpush2.msra.mxu0 0.0
    %276 = vmatprep.subr.mxu0 0.0
    %277 = vmatpush2.msra.mxu0 0.0
    %278 = vmatprep.subr.mxu0 0.0
    %279 = vmatpush2.msra.mxu0 0.0
    %280 = vmatprep.subr.mxu0 0.0
    %281 = vmatpush2.msra.mxu0 0.0
    %282 = vmatprep.subr.mxu0 0.0
    %283 = vmatpush2.msra.mxu0 0.0
    %284 = vmatprep.subr.mxu0 0.0
    %285 = vmatpush2.msra.mxu0 0.0
    %286 = vmatprep.subr.mxu0 0.0
    %287 = vmatpush2.msra.mxu0 0.0
    %288 = vmatprep.subr.mxu0 0.0
    %289 = vmatpush2.msra.mxu0 0.0
    %290 = vmatprep.subr.mxu0 0.0
    %291 = vmatpush2.msra.mxu0 0.0
    %292 = vmatprep.subr.mxu0 0.0
    %293 = vmatpush2.msra.mxu0 0.0
    %294 = vmatprep.subr.mxu0 0.0
    %295 = vmatpush2.msra.mxu0 0.0
    %296 = vmatprep.subr.mxu0 0.0
    %297 = vmatpush2.msra.mxu0 0.0
    %298 = vmatprep.subr.mxu0 0.0
    %299 = vmatpush2.msra.mxu0 0.0
    %300 = vmatprep.subr.mxu0 0.0
    %301 = vmatpush2.msra.mxu0 0.0
    %302 = vmatprep.subr.mxu0 0.0
    %303 = vmatpush2.msra.mxu0 0.0
    %304 = vmatprep.subr.mxu0 0.0
    %305 = vmatpush2.msra.mxu0 0.0
    %306 = vmatprep.mubr.f32.mxu0 0.0
    %307 = vmatmul.mubr.f32.gmra.mxu0 %v236
    %v308 = vpop.f32.mrf.mxu0
    %v309 = vadd.f32 %v232, %v308
    %v310 = vpop.f32.mrf.mxu0
    %311 = vdwg.mxu0
    %vm312 = vcmask 80896
    %v313 = vsel %vm312, %v309, -inf
    %314 = vmax.xlane.f32.xlu0 %v313
    %v315 = vpop.xlane.xlu0 %314
    %v316 = vsub.f32 %v309, %v315
    %v317 = vmul.f32 %v316, 1.442695
    %v318 = vpow.pop %v317
    %v319 = vsel %vm312, %v318, 0.0
    %320 = vadd.xlane.f32.xlu0 %v319
    %v321 = vpop.xlane.xlu0 %320
    %v322 = vlog2.pop %v321
    %v323 = vmul.f32 %v322, 0.6931472
    %v324 = vsub.f32 %v316, %v323
    %325 = vst.msk [vmem:[#allocation7] sm:$0xff] %vm312, %v324
    // Predicated region
    $region34: #{tpu_custom_call.1} parent=1 // pred_check
      _
    $region35: #{tpu_custom_call.1} parent=1 // pred_check_branch
      %327 = sbr.rel (0) target = $region37
    $region36: #{tpu_custom_call.1} parent=1 // pred_region
      %s329 = ssub.s32 128, 128
      %330 = vsyncadd [#allocation6], %s329
      %s332 = sshll.u32 [#allocation7], 4
      %s333 = int_to_ptr.vmem [resolvable:$true] %s332
      %335 = dma.vmem_to_hbm [thread:$0]  %s333, 128, %s8, [#allocation6]
    $region37: #{tpu_custom_call.1} parent=1 // pred_fallthru
      _
    // Predicated region
    $region38: #{tpu_custom_call.1} parent=1 // pred_check
      _
    $region39: #{tpu_custom_call.1} parent=1 // pred_check_branch
      %337 = sbr.rel (0) target = $region41
    $region40: #{tpu_custom_call.1} parent=1 // pred_region
      %338 = dma.done [#allocation6], 128
    $region41: #{tpu_custom_call.1} parent=1 // pred_fallthru
      _
    %339 = vsyncpa [#allocation5], 1
    %340 = vsyncpa [#allocation6], 1

</llo_original>
